<compile_context>
chip_gen: v7x
topology: tpu7x:2x2x1
jax: 0.10.0
libtpu: 0.0.40
codegen_flags: <defaults>
</compile_context>

<pallas_src>
import math

import jax
import jax.numpy as jnp
from jax.experimental import pallas as pl
from jax.experimental.pallas import tpu as pltpu

K = 4             # number of layers in the CDF network
R = 3             # hidden width
LANE = 128        # lane width of the activation slab
PAR_STRIDE = 64   # flat per-channel parameter stride in the SMEM table
STRIP = 256       # sublane rows per inner-loop strip (keeps intermediates small)
MAX_SUB_BLOCK = 4096   # max sublane rows per grid block (2 MiB f32 per block)

# Flat parameter layout (per channel, offset = c * PAR_STRIDE + i), all
# transcendentals precomputed in the wrapper:
#   [ 0: 3)  w0[r]        = softplus(H0)[0, r]
#   [ 3:12)  w1[d, r]     = softplus(H1) row-major (3x3)
#   [12:21)  w2[d, r]     = softplus(H2) row-major (3x3)
#   [21:24)  w3[d]        = softplus(H3)[d, 0]
#   [24:27)  b0_plus[r]   = b0[r] + 0.5 * w0[r]
#   [27:30)  b0_minus[r]  = b0[r] - 0.5 * w0[r]
#   [30:33)  b1   [33:36) b2   [36] b3
#   [37:40)  tanh(a0)   [40:43) tanh(a1)   [43:46) tanh(a2)
#   rest: zero padding


def _round_up(x, m):
    return ((x + m - 1) // m) * m


# ---------------------------------------------------------------------------
# Pallas kernel factory: one (channel, batch, spatial-block) per grid step.
# ---------------------------------------------------------------------------
def make_balle_kernel(s_blk, strip):
    n_strips = s_blk // strip

    def kernel(par_ref, x_ref, out_ref):
        c = pl.program_id(0)
        base = c * PAR_STRIDE

        def p(i):                      # cheap scalar read from the SMEM table
            return par_ref[base + i]

        w0  = [p(r) for r in range(R)]
        w1  = [[p(3 + R * d + r) for r in range(R)] for d in range(R)]
        w2  = [[p(12 + R * d + r) for r in range(R)] for d in range(R)]
        w3  = [p(21 + d) for d in range(R)]
        b0p = [p(24 + r) for r in range(R)]
        b0m = [p(27 + r) for r in range(R)]
        b1  = [p(30 + r) for r in range(R)]
        b2  = [p(33 + r) for r in range(R)]
        b3  = p(36)
        ta0 = [p(37 + r) for r in range(R)]
        ta1 = [p(40 + r) for r in range(R)]
        ta2 = [p(43 + r) for r in range(R)]

        def gate(v, ta):               # v + tanh(a) * tanh(v), elementwise
            return [v[r] + ta[r] * jnp.tanh(v[r]) for r in range(R)]

        def affine(v, w, b):           # 3 -> 3 scalar-broadcast FMAs
            return [v[0] * w[0][r] + v[1] * w[1][r] + v[2] * w[2][r] + b[r]
                    for r in range(R)]

        def cdf_from_l0(u):            # u = layer-0 pre-activation (list of 3)
            t = affine(gate(u, ta0), w1, b1)
            s = affine(gate(t, ta1), w2, b2)
            s = gate(s, ta2)
            z = s[0] * w3[0] + s[1] * w3[1] + s[2] * w3[2] + b3
            return jax.nn.sigmoid(z)

        def compute(off):
            xs = x_ref[0, 0, pl.ds(off, strip), :]          # (strip, 128) f32
            xw = [xs * w0[r] for r in range(R)]             # shared by both branches
            cp = cdf_from_l0([xw[r] + b0p[r] for r in range(R)])  # c_x(x + 0.5)
            cm = cdf_from_l0([xw[r] + b0m[r] for r in range(R)])  # c_x(x - 0.5)
            out_ref[0, 0, pl.ds(off, strip), :] = cp - cm

        if n_strips == 1:
            compute(0)
        else:
            def body(i, carry):
                compute(pl.multiple_of(i * strip, strip))
                return carry
            jax.lax.fori_loop(0, n_strips, body, 0)

    return kernel


# ---------------------------------------------------------------------------
# Parameter packing: softplus/tanh precomputed once, flat (C*PAR_STRIDE,) f32.
# ---------------------------------------------------------------------------
def pack_params(params):
    h0, h1, h2, h3 = params["h"]   # (C,1,3) (C,3,3) (C,3,3) (C,3,1)
    b0, b1, b2, b3 = params["b"]   # (C,1,3) x3, (C,1,1)
    a0, a1, a2 = params["a"]       # (C,1,3) x3
    C = h0.shape[0]
    w0 = jax.nn.softplus(h0).reshape(C, R)
    b0f = b0.reshape(C, R)
    cols = [
        w0,                                          # 0:3
        jax.nn.softplus(h1).reshape(C, R * R),       # 3:12
        jax.nn.softplus(h2).reshape(C, R * R),       # 12:21
        jax.nn.softplus(h3).reshape(C, R),           # 21:24
        b0f + 0.5 * w0,                              # 24:27  b0_plus
        b0f - 0.5 * w0,                              # 27:30  b0_minus
        b1.reshape(C, R),                            # 30:33
        b2.reshape(C, R),                            # 33:36
        b3.reshape(C, 1),                            # 36
        jnp.tanh(a0).reshape(C, R),                  # 37:40
        jnp.tanh(a1).reshape(C, R),                  # 40:43
        jnp.tanh(a2).reshape(C, R),                  # 43:46
    ]
    tab = jnp.concatenate(cols, axis=1).astype(jnp.float32)      # (C, 46)
    tab = jnp.pad(tab, ((0, 0), (0, PAR_STRIDE - tab.shape[1]))) # (C, 64)
    return tab.reshape(C * PAR_STRIDE)


# ---------------------------------------------------------------------------
# Wrapper: NCHW stays NCHW; only a (free) reshape + optional trailing-dim pad.
# ---------------------------------------------------------------------------
def balle_pdf_estim(x, params):
    B, C, H, W = x.shape
    HW = H * W

    # Spatial tiling: pad the flattened H*W axis up to a multiple of the block
    # so the block size never collapses for awkward shapes.
    sp_raw = pl.cdiv(HW, LANE)
    sp8 = _round_up(sp_raw, 8)
    if sp8 <= STRIP:
        s_blk = sp8
    elif sp8 <= MAX_SUB_BLOCK:
        s_blk = _round_up(sp8, STRIP)
    else:
        g = pl.cdiv(sp8, MAX_SUB_BLOCK)
        s_blk = _round_up(pl.cdiv(sp8, g), STRIP)
    sp = _round_up(sp8, s_blk)
    grid_s = sp // s_blk
    strip = min(STRIP, s_blk)

    n_pad = sp * LANE
    xf = x.reshape(B, C, HW).astype(jnp.float32)
    if n_pad != HW:
        xf = jnp.pad(xf, ((0, 0), (0, 0), (0, n_pad - HW)))
    x4 = xf.reshape(B, C, sp, LANE)                 # NCHW-compatible, free view

    table = pack_params(params)                     # (C*PAR_STRIDE,) f32, SMEM

    kernel = make_balle_kernel(s_blk, strip)

    out = pl.pallas_call(
        kernel,
        out_shape=jax.ShapeDtypeStruct((B, C, sp, LANE), jnp.float32),
        grid_spec=pltpu.PrefetchScalarGridSpec(
            num_scalar_prefetch=1,                  # table -> SMEM once, pre-grid
            grid=(C, B, grid_s),
            in_specs=[pl.BlockSpec((1, 1, s_blk, LANE),
                                   lambda c, b, s, par: (b, c, s, 0))],
            out_specs=pl.BlockSpec((1, 1, s_blk, LANE),
                                   lambda c, b, s, par: (b, c, s, 0)),
        ),
        # All grid axes independent.  On v7x, if xprof shows a single TC running
        # every step, the leading axis can be switched to pltpu.CORE_PARALLEL.
        compiler_params=pltpu.CompilerParams(
            dimension_semantics=("parallel", "parallel", "parallel"),
            vmem_limit_bytes=32 * 1024 * 1024,
        ),
    )(table, x4)

    out = out.reshape(B, C, n_pad)
    if n_pad != HW:
        out = out[:, :, :HW]
    return out.reshape(B, C, H, W)                  # already NCHW, no transpose


# ---------------------------------------------------------------------------
# Deterministic parameter init (mirrors xavier_init * sqrt(nb_channel))
# ---------------------------------------------------------------------------
def init_params(key, C):
    def xav(k, shape):
        scale = math.sqrt(2.0 / math.prod(shape)) * math.sqrt(float(C))
        return jax.random.normal(k, shape, jnp.float32) * scale

    ks = jax.random.split(key, 11)
    h0 = xav(ks[0], (C, 1, R))
    h1 = xav(ks[1], (C, R, R))
    h2 = xav(ks[2], (C, R, R))
    h3 = xav(ks[3], (C, R, 1))
    b0 = xav(ks[4], (C, R)).reshape(C, 1, R)
    b1 = xav(ks[5], (C, R)).reshape(C, 1, R)
    b2 = xav(ks[6], (C, R)).reshape(C, 1, R)
    b3 = xav(ks[7], (C, 1)).reshape(C, 1, 1)
    a0 = xav(ks[8], (C, R)).reshape(C, 1, R)
    a1 = xav(ks[9], (C, R)).reshape(C, 1, R)
    a2 = xav(ks[10], (C, R)).reshape(C, 1, R)
    return {"h": (h0, h1, h2, h3), "b": (b0, b1, b2, b3), "a": (a0, a1, a2)}


# ---------------------------------------------------------------------------
# Pure-JAX reference (mirrors the PyTorch forward exactly)
# ---------------------------------------------------------------------------
def ref_forward(x, params):
    B, C, H, W = x.shape
    hs = [jax.nn.softplus(h) for h in params["h"]]
    bs = params["b"]
    gs = params["a"]

    def cdf(v):  # v: (B, C, H*W, 1)
        t = v
        for i in range(K):
            t = jnp.einsum("bced,cdr->bcer", t, hs[i])
            t = t + bs[i][None, :, :, :]
            if i != K - 1:
                t = t + jnp.tanh(gs[i][None, :, :, :]) * jnp.tanh(t)
            else:
                t = jax.nn.sigmoid(t)
        return t

    xv = x.reshape(B, C, H * W, 1)
    p = cdf(xv + 0.5) - cdf(xv - 0.5)
    return p.reshape(B, C, H, W)


if __name__ == "__main__":
    B, C, H, W = 2, 4, 16, 16
    key = jax.random.PRNGKey(0)
    kx, kp = jax.random.split(key)
    x = jax.random.normal(kx, (B, C, H, W), jnp.float32)
    params = init_params(kp, C)

    out = jax.block_until_ready(balle_pdf_estim(x, params))

    ref = ref_forward(x, params)
    assert out.shape == (B, C, H, W)
    max_err = float(jnp.max(jnp.abs(out - ref)))
    assert bool(jnp.allclose(out, ref, atol=2e-4, rtol=2e-4)), max_err
    print("KERNEL_OK")
</pallas_src>

<mosaic_0001>
module attributes {stable_mosaic.version = 11 : i64} {
  func.func @kernel(%arg0: i32, %arg1: i32, %arg2: i32, %arg3: memref<256xf32, #tpu.memory_space<smem>>, %arg4: memref<1x1x8x128xf32, #tpu.memory_space<vmem>>, %arg5: memref<1x1x8x128xf32, #tpu.memory_space<vmem>>) attributes {dimension_semantics = [#tpu.dimension_semantics<parallel>, #tpu.dimension_semantics<parallel>, #tpu.dimension_semantics<parallel>], iteration_bounds = array<i64: 4, 2, 1>, scalar_prefetch = 1 : i64, scratch_operands = 0 : i64, tpu.core_type = #tpu.core_type<tc>, window_params = [{transform_indices = @transform_0, window_bounds = array<i64: 1, 1, 8, 128>}, {transform_indices = @transform_1, window_bounds = array<i64: 1, 1, 8, 128>}]} {
    %c64_i32 = arith.constant 64 : i32
    %0 = arith.muli %arg0, %c64_i32 : i32
    %c0_i32 = arith.constant 0 : i32
    %1 = arith.addi %0, %c0_i32 : i32
    %2 = arith.index_cast %1 : i32 to index
    %3 = memref.load %arg3[%2] : memref<256xf32, #tpu.memory_space<smem>>
    %c1_i32 = arith.constant 1 : i32
    %4 = arith.addi %0, %c1_i32 : i32
    %5 = arith.index_cast %4 : i32 to index
    %6 = memref.load %arg3[%5] : memref<256xf32, #tpu.memory_space<smem>>
    %c2_i32 = arith.constant 2 : i32
    %7 = arith.addi %0, %c2_i32 : i32
    %8 = arith.index_cast %7 : i32 to index
    %9 = memref.load %arg3[%8] : memref<256xf32, #tpu.memory_space<smem>>
    %c3_i32 = arith.constant 3 : i32
    %10 = arith.addi %0, %c3_i32 : i32
    %11 = arith.index_cast %10 : i32 to index
    %12 = memref.load %arg3[%11] : memref<256xf32, #tpu.memory_space<smem>>
    %c4_i32 = arith.constant 4 : i32
    %13 = arith.addi %0, %c4_i32 : i32
    %14 = arith.index_cast %13 : i32 to index
    %15 = memref.load %arg3[%14] : memref<256xf32, #tpu.memory_space<smem>>
    %c5_i32 = arith.constant 5 : i32
    %16 = arith.addi %0, %c5_i32 : i32
    %17 = arith.index_cast %16 : i32 to index
    %18 = memref.load %arg3[%17] : memref<256xf32, #tpu.memory_space<smem>>
    %c6_i32 = arith.constant 6 : i32
    %19 = arith.addi %0, %c6_i32 : i32
    %20 = arith.index_cast %19 : i32 to index
    %21 = memref.load %arg3[%20] : memref<256xf32, #tpu.memory_space<smem>>
    %c7_i32 = arith.constant 7 : i32
    %22 = arith.addi %0, %c7_i32 : i32
    %23 = arith.index_cast %22 : i32 to index
    %24 = memref.load %arg3[%23] : memref<256xf32, #tpu.memory_space<smem>>
    %c8_i32 = arith.constant 8 : i32
    %25 = arith.addi %0, %c8_i32 : i32
    %26 = arith.index_cast %25 : i32 to index
    %27 = memref.load %arg3[%26] : memref<256xf32, #tpu.memory_space<smem>>
    %c9_i32 = arith.constant 9 : i32
    %28 = arith.addi %0, %c9_i32 : i32
    %29 = arith.index_cast %28 : i32 to index
    %30 = memref.load %arg3[%29] : memref<256xf32, #tpu.memory_space<smem>>
    %c10_i32 = arith.constant 10 : i32
    %31 = arith.addi %0, %c10_i32 : i32
    %32 = arith.index_cast %31 : i32 to index
    %33 = memref.load %arg3[%32] : memref<256xf32, #tpu.memory_space<smem>>
    %c11_i32 = arith.constant 11 : i32
    %34 = arith.addi %0, %c11_i32 : i32
    %35 = arith.index_cast %34 : i32 to index
    %36 = memref.load %arg3[%35] : memref<256xf32, #tpu.memory_space<smem>>
    %c12_i32 = arith.constant 12 : i32
    %37 = arith.addi %0, %c12_i32 : i32
    %38 = arith.index_cast %37 : i32 to index
    %39 = memref.load %arg3[%38] : memref<256xf32, #tpu.memory_space<smem>>
    %c13_i32 = arith.constant 13 : i32
    %40 = arith.addi %0, %c13_i32 : i32
    %41 = arith.index_cast %40 : i32 to index
    %42 = memref.load %arg3[%41] : memref<256xf32, #tpu.memory_space<smem>>
    %c14_i32 = arith.constant 14 : i32
    %43 = arith.addi %0, %c14_i32 : i32
    %44 = arith.index_cast %43 : i32 to index
    %45 = memref.load %arg3[%44] : memref<256xf32, #tpu.memory_space<smem>>
    %c15_i32 = arith.constant 15 : i32
    %46 = arith.addi %0, %c15_i32 : i32
    %47 = arith.index_cast %46 : i32 to index
    %48 = memref.load %arg3[%47] : memref<256xf32, #tpu.memory_space<smem>>
    %c16_i32 = arith.constant 16 : i32
    %49 = arith.addi %0, %c16_i32 : i32
    %50 = arith.index_cast %49 : i32 to index
    %51 = memref.load %arg3[%50] : memref<256xf32, #tpu.memory_space<smem>>
    %c17_i32 = arith.constant 17 : i32
    %52 = arith.addi %0, %c17_i32 : i32
    %53 = arith.index_cast %52 : i32 to index
    %54 = memref.load %arg3[%53] : memref<256xf32, #tpu.memory_space<smem>>
    %c18_i32 = arith.constant 18 : i32
    %55 = arith.addi %0, %c18_i32 : i32
    %56 = arith.index_cast %55 : i32 to index
    %57 = memref.load %arg3[%56] : memref<256xf32, #tpu.memory_space<smem>>
    %c19_i32 = arith.constant 19 : i32
    %58 = arith.addi %0, %c19_i32 : i32
    %59 = arith.index_cast %58 : i32 to index
    %60 = memref.load %arg3[%59] : memref<256xf32, #tpu.memory_space<smem>>
    %c20_i32 = arith.constant 20 : i32
    %61 = arith.addi %0, %c20_i32 : i32
    %62 = arith.index_cast %61 : i32 to index
    %63 = memref.load %arg3[%62] : memref<256xf32, #tpu.memory_space<smem>>
    %c21_i32 = arith.constant 21 : i32
    %64 = arith.addi %0, %c21_i32 : i32
    %65 = arith.index_cast %64 : i32 to index
    %66 = memref.load %arg3[%65] : memref<256xf32, #tpu.memory_space<smem>>
    %c22_i32 = arith.constant 22 : i32
    %67 = arith.addi %0, %c22_i32 : i32
    %68 = arith.index_cast %67 : i32 to index
    %69 = memref.load %arg3[%68] : memref<256xf32, #tpu.memory_space<smem>>
    %c23_i32 = arith.constant 23 : i32
    %70 = arith.addi %0, %c23_i32 : i32
    %71 = arith.index_cast %70 : i32 to index
    %72 = memref.load %arg3[%71] : memref<256xf32, #tpu.memory_space<smem>>
    %c24_i32 = arith.constant 24 : i32
    %73 = arith.addi %0, %c24_i32 : i32
    %74 = arith.index_cast %73 : i32 to index
    %75 = memref.load %arg3[%74] : memref<256xf32, #tpu.memory_space<smem>>
    %c25_i32 = arith.constant 25 : i32
    %76 = arith.addi %0, %c25_i32 : i32
    %77 = arith.index_cast %76 : i32 to index
    %78 = memref.load %arg3[%77] : memref<256xf32, #tpu.memory_space<smem>>
    %c26_i32 = arith.constant 26 : i32
    %79 = arith.addi %0, %c26_i32 : i32
    %80 = arith.index_cast %79 : i32 to index
    %81 = memref.load %arg3[%80] : memref<256xf32, #tpu.memory_space<smem>>
    %c27_i32 = arith.constant 27 : i32
    %82 = arith.addi %0, %c27_i32 : i32
    %83 = arith.index_cast %82 : i32 to index
    %84 = memref.load %arg3[%83] : memref<256xf32, #tpu.memory_space<smem>>
    %c28_i32 = arith.constant 28 : i32
    %85 = arith.addi %0, %c28_i32 : i32
    %86 = arith.index_cast %85 : i32 to index
    %87 = memref.load %arg3[%86] : memref<256xf32, #tpu.memory_space<smem>>
    %c29_i32 = arith.constant 29 : i32
    %88 = arith.addi %0, %c29_i32 : i32
    %89 = arith.index_cast %88 : i32 to index
    %90 = memref.load %arg3[%89] : memref<256xf32, #tpu.memory_space<smem>>
    %c30_i32 = arith.constant 30 : i32
    %91 = arith.addi %0, %c30_i32 : i32
    %92 = arith.index_cast %91 : i32 to index
    %93 = memref.load %arg3[%92] : memref<256xf32, #tpu.memory_space<smem>>
    %c31_i32 = arith.constant 31 : i32
    %94 = arith.addi %0, %c31_i32 : i32
    %95 = arith.index_cast %94 : i32 to index
    %96 = memref.load %arg3[%95] : memref<256xf32, #tpu.memory_space<smem>>
    %c32_i32 = arith.constant 32 : i32
    %97 = arith.addi %0, %c32_i32 : i32
    %98 = arith.index_cast %97 : i32 to index
    %99 = memref.load %arg3[%98] : memref<256xf32, #tpu.memory_space<smem>>
    %c33_i32 = arith.constant 33 : i32
    %100 = arith.addi %0, %c33_i32 : i32
    %101 = arith.index_cast %100 : i32 to index
    %102 = memref.load %arg3[%101] : memref<256xf32, #tpu.memory_space<smem>>
    %c34_i32 = arith.constant 34 : i32
    %103 = arith.addi %0, %c34_i32 : i32
    %104 = arith.index_cast %103 : i32 to index
    %105 = memref.load %arg3[%104] : memref<256xf32, #tpu.memory_space<smem>>
    %c35_i32 = arith.constant 35 : i32
    %106 = arith.addi %0, %c35_i32 : i32
    %107 = arith.index_cast %106 : i32 to index
    %108 = memref.load %arg3[%107] : memref<256xf32, #tpu.memory_space<smem>>
    %c36_i32 = arith.constant 36 : i32
    %109 = arith.addi %0, %c36_i32 : i32
    %110 = arith.index_cast %109 : i32 to index
    %111 = memref.load %arg3[%110] : memref<256xf32, #tpu.memory_space<smem>>
    %c37_i32 = arith.constant 37 : i32
    %112 = arith.addi %0, %c37_i32 : i32
    %113 = arith.index_cast %112 : i32 to index
    %114 = memref.load %arg3[%113] : memref<256xf32, #tpu.memory_space<smem>>
    %c38_i32 = arith.constant 38 : i32
    %115 = arith.addi %0, %c38_i32 : i32
    %116 = arith.index_cast %115 : i32 to index
    %117 = memref.load %arg3[%116] : memref<256xf32, #tpu.memory_space<smem>>
    %c39_i32 = arith.constant 39 : i32
    %118 = arith.addi %0, %c39_i32 : i32
    %119 = arith.index_cast %118 : i32 to index
    %120 = memref.load %arg3[%119] : memref<256xf32, #tpu.memory_space<smem>>
    %c40_i32 = arith.constant 40 : i32
    %121 = arith.addi %0, %c40_i32 : i32
    %122 = arith.index_cast %121 : i32 to index
    %123 = memref.load %arg3[%122] : memref<256xf32, #tpu.memory_space<smem>>
    %c41_i32 = arith.constant 41 : i32
    %124 = arith.addi %0, %c41_i32 : i32
    %125 = arith.index_cast %124 : i32 to index
    %126 = memref.load %arg3[%125] : memref<256xf32, #tpu.memory_space<smem>>
    %c42_i32 = arith.constant 42 : i32
    %127 = arith.addi %0, %c42_i32 : i32
    %128 = arith.index_cast %127 : i32 to index
    %129 = memref.load %arg3[%128] : memref<256xf32, #tpu.memory_space<smem>>
    %c43_i32 = arith.constant 43 : i32
    %130 = arith.addi %0, %c43_i32 : i32
    %131 = arith.index_cast %130 : i32 to index
    %132 = memref.load %arg3[%131] : memref<256xf32, #tpu.memory_space<smem>>
    %c44_i32 = arith.constant 44 : i32
    %133 = arith.addi %0, %c44_i32 : i32
    %134 = arith.index_cast %133 : i32 to index
    %135 = memref.load %arg3[%134] : memref<256xf32, #tpu.memory_space<smem>>
    %c45_i32 = arith.constant 45 : i32
    %136 = arith.addi %0, %c45_i32 : i32
    %137 = arith.index_cast %136 : i32 to index
    %138 = memref.load %arg3[%137] : memref<256xf32, #tpu.memory_space<smem>>
    %c0 = arith.constant 0 : index
    %c0_0 = arith.constant 0 : index
    %c0_1 = arith.constant 0 : index
    %c0_2 = arith.constant 0 : index
    %139 = vector.load %arg4[%c0, %c0_0, %c0_1, %c0_2] : memref<1x1x8x128xf32, #tpu.memory_space<vmem>>, vector<1x1x8x128xf32>
    %140 = vector.shape_cast %139 : vector<1x1x8x128xf32> to vector<8x128xf32>
    %141 = vector.broadcast %3 : f32 to vector<8x128xf32>
    %142 = arith.mulf %140, %141 : vector<8x128xf32>
    %143 = vector.broadcast %6 : f32 to vector<8x128xf32>
    %144 = arith.mulf %140, %143 : vector<8x128xf32>
    %145 = vector.broadcast %9 : f32 to vector<8x128xf32>
    %146 = arith.mulf %140, %145 : vector<8x128xf32>
    %147 = vector.broadcast %75 : f32 to vector<8x128xf32>
    %148 = arith.addf %142, %147 : vector<8x128xf32>
    %149 = vector.broadcast %78 : f32 to vector<8x128xf32>
    %150 = arith.addf %144, %149 : vector<8x128xf32>
    %151 = vector.broadcast %81 : f32 to vector<8x128xf32>
    %152 = arith.addf %146, %151 : vector<8x128xf32>
    %153 = math.tanh %148 : vector<8x128xf32>
    %154 = vector.broadcast %114 : f32 to vector<8x128xf32>
    %155 = arith.mulf %154, %153 : vector<8x128xf32>
    %156 = arith.addf %148, %155 : vector<8x128xf32>
    %157 = math.tanh %150 : vector<8x128xf32>
    %158 = vector.broadcast %117 : f32 to vector<8x128xf32>
    %159 = arith.mulf %158, %157 : vector<8x128xf32>
    %160 = arith.addf %150, %159 : vector<8x128xf32>
    %161 = math.tanh %152 : vector<8x128xf32>
    %162 = vector.broadcast %120 : f32 to vector<8x128xf32>
    %163 = arith.mulf %162, %161 : vector<8x128xf32>
    %164 = arith.addf %152, %163 : vector<8x128xf32>
    %165 = vector.broadcast %12 : f32 to vector<8x128xf32>
    %166 = arith.mulf %156, %165 : vector<8x128xf32>
    %167 = vector.broadcast %21 : f32 to vector<8x128xf32>
    %168 = arith.mulf %160, %167 : vector<8x128xf32>
    %169 = arith.addf %166, %168 : vector<8x128xf32>
    %170 = vector.broadcast %30 : f32 to vector<8x128xf32>
    %171 = arith.mulf %164, %170 : vector<8x128xf32>
    %172 = arith.addf %169, %171 : vector<8x128xf32>
    %173 = vector.broadcast %93 : f32 to vector<8x128xf32>
    %174 = arith.addf %172, %173 : vector<8x128xf32>
    %175 = vector.broadcast %15 : f32 to vector<8x128xf32>
    %176 = arith.mulf %156, %175 : vector<8x128xf32>
    %177 = vector.broadcast %24 : f32 to vector<8x128xf32>
    %178 = arith.mulf %160, %177 : vector<8x128xf32>
    %179 = arith.addf %176, %178 : vector<8x128xf32>
    %180 = vector.broadcast %33 : f32 to vector<8x128xf32>
    %181 = arith.mulf %164, %180 : vector<8x128xf32>
    %182 = arith.addf %179, %181 : vector<8x128xf32>
    %183 = vector.broadcast %96 : f32 to vector<8x128xf32>
    %184 = arith.addf %182, %183 : vector<8x128xf32>
    %185 = vector.broadcast %18 : f32 to vector<8x128xf32>
    %186 = arith.mulf %156, %185 : vector<8x128xf32>
    %187 = vector.broadcast %27 : f32 to vector<8x128xf32>
    %188 = arith.mulf %160, %187 : vector<8x128xf32>
    %189 = arith.addf %186, %188 : vector<8x128xf32>
    %190 = vector.broadcast %36 : f32 to vector<8x128xf32>
    %191 = arith.mulf %164, %190 : vector<8x128xf32>
    %192 = arith.addf %189, %191 : vector<8x128xf32>
    %193 = vector.broadcast %99 : f32 to vector<8x128xf32>
    %194 = arith.addf %192, %193 : vector<8x128xf32>
    %195 = math.tanh %174 : vector<8x128xf32>
    %196 = vector.broadcast %123 : f32 to vector<8x128xf32>
    %197 = arith.mulf %196, %195 : vector<8x128xf32>
    %198 = arith.addf %174, %197 : vector<8x128xf32>
    %199 = math.tanh %184 : vector<8x128xf32>
    %200 = vector.broadcast %126 : f32 to vector<8x128xf32>
    %201 = arith.mulf %200, %199 : vector<8x128xf32>
    %202 = arith.addf %184, %201 : vector<8x128xf32>
    %203 = math.tanh %194 : vector<8x128xf32>
    %204 = vector.broadcast %129 : f32 to vector<8x128xf32>
    %205 = arith.mulf %204, %203 : vector<8x128xf32>
    %206 = arith.addf %194, %205 : vector<8x128xf32>
    %207 = vector.broadcast %39 : f32 to vector<8x128xf32>
    %208 = arith.mulf %198, %207 : vector<8x128xf32>
    %209 = vector.broadcast %48 : f32 to vector<8x128xf32>
    %210 = arith.mulf %202, %209 : vector<8x128xf32>
    %211 = arith.addf %208, %210 : vector<8x128xf32>
    %212 = vector.broadcast %57 : f32 to vector<8x128xf32>
    %213 = arith.mulf %206, %212 : vector<8x128xf32>
    %214 = arith.addf %211, %213 : vector<8x128xf32>
    %215 = vector.broadcast %102 : f32 to vector<8x128xf32>
    %216 = arith.addf %214, %215 : vector<8x128xf32>
    %217 = vector.broadcast %42 : f32 to vector<8x128xf32>
    %218 = arith.mulf %198, %217 : vector<8x128xf32>
    %219 = vector.broadcast %51 : f32 to vector<8x128xf32>
    %220 = arith.mulf %202, %219 : vector<8x128xf32>
    %221 = arith.addf %218, %220 : vector<8x128xf32>
    %222 = vector.broadcast %60 : f32 to vector<8x128xf32>
    %223 = arith.mulf %206, %222 : vector<8x128xf32>
    %224 = arith.addf %221, %223 : vector<8x128xf32>
    %225 = vector.broadcast %105 : f32 to vector<8x128xf32>
    %226 = arith.addf %224, %225 : vector<8x128xf32>
    %227 = vector.broadcast %45 : f32 to vector<8x128xf32>
    %228 = arith.mulf %198, %227 : vector<8x128xf32>
    %229 = vector.broadcast %54 : f32 to vector<8x128xf32>
    %230 = arith.mulf %202, %229 : vector<8x128xf32>
    %231 = arith.addf %228, %230 : vector<8x128xf32>
    %232 = vector.broadcast %63 : f32 to vector<8x128xf32>
    %233 = arith.mulf %206, %232 : vector<8x128xf32>
    %234 = arith.addf %231, %233 : vector<8x128xf32>
    %235 = vector.broadcast %108 : f32 to vector<8x128xf32>
    %236 = arith.addf %234, %235 : vector<8x128xf32>
    %237 = math.tanh %216 : vector<8x128xf32>
    %238 = vector.broadcast %132 : f32 to vector<8x128xf32>
    %239 = arith.mulf %238, %237 : vector<8x128xf32>
    %240 = arith.addf %216, %239 : vector<8x128xf32>
    %241 = math.tanh %226 : vector<8x128xf32>
    %242 = vector.broadcast %135 : f32 to vector<8x128xf32>
    %243 = arith.mulf %242, %241 : vector<8x128xf32>
    %244 = arith.addf %226, %243 : vector<8x128xf32>
    %245 = math.tanh %236 : vector<8x128xf32>
    %246 = vector.broadcast %138 : f32 to vector<8x128xf32>
    %247 = arith.mulf %246, %245 : vector<8x128xf32>
    %248 = arith.addf %236, %247 : vector<8x128xf32>
    %249 = vector.broadcast %66 : f32 to vector<8x128xf32>
    %250 = arith.mulf %240, %249 : vector<8x128xf32>
    %251 = vector.broadcast %69 : f32 to vector<8x128xf32>
    %252 = arith.mulf %244, %251 : vector<8x128xf32>
    %253 = arith.addf %250, %252 : vector<8x128xf32>
    %254 = vector.broadcast %72 : f32 to vector<8x128xf32>
    %255 = arith.mulf %248, %254 : vector<8x128xf32>
    %256 = arith.addf %253, %255 : vector<8x128xf32>
    %257 = vector.broadcast %111 : f32 to vector<8x128xf32>
    %258 = arith.addf %256, %257 : vector<8x128xf32>
    %259 = arith.negf %258 : vector<8x128xf32>
    %260 = math.exp %259 : vector<8x128xf32>
    %cst = arith.constant 1.000000e+00 : f32
    %261 = vector.broadcast %cst : f32 to vector<8x128xf32>
    %262 = arith.addf %261, %260 : vector<8x128xf32>
    %263 = arith.divf %261, %262 : vector<8x128xf32>
    %264 = vector.broadcast %84 : f32 to vector<8x128xf32>
    %265 = arith.addf %142, %264 : vector<8x128xf32>
    %266 = vector.broadcast %87 : f32 to vector<8x128xf32>
    %267 = arith.addf %144, %266 : vector<8x128xf32>
    %268 = vector.broadcast %90 : f32 to vector<8x128xf32>
    %269 = arith.addf %146, %268 : vector<8x128xf32>
    %270 = math.tanh %265 : vector<8x128xf32>
    %271 = vector.broadcast %114 : f32 to vector<8x128xf32>
    %272 = arith.mulf %271, %270 : vector<8x128xf32>
    %273 = arith.addf %265, %272 : vector<8x128xf32>
    %274 = math.tanh %267 : vector<8x128xf32>
    %275 = vector.broadcast %117 : f32 to vector<8x128xf32>
    %276 = arith.mulf %275, %274 : vector<8x128xf32>
    %277 = arith.addf %267, %276 : vector<8x128xf32>
    %278 = math.tanh %269 : vector<8x128xf32>
    %279 = vector.broadcast %120 : f32 to vector<8x128xf32>
    %280 = arith.mulf %279, %278 : vector<8x128xf32>
    %281 = arith.addf %269, %280 : vector<8x128xf32>
    %282 = vector.broadcast %12 : f32 to vector<8x128xf32>
    %283 = arith.mulf %273, %282 : vector<8x128xf32>
    %284 = vector.broadcast %21 : f32 to vector<8x128xf32>
    %285 = arith.mulf %277, %284 : vector<8x128xf32>
    %286 = arith.addf %283, %285 : vector<8x128xf32>
    %287 = vector.broadcast %30 : f32 to vector<8x128xf32>
    %288 = arith.mulf %281, %287 : vector<8x128xf32>
    %289 = arith.addf %286, %288 : vector<8x128xf32>
    %290 = vector.broadcast %93 : f32 to vector<8x128xf32>
    %291 = arith.addf %289, %290 : vector<8x128xf32>
    %292 = vector.broadcast %15 : f32 to vector<8x128xf32>
    %293 = arith.mulf %273, %292 : vector<8x128xf32>
    %294 = vector.broadcast %24 : f32 to vector<8x128xf32>
    %295 = arith.mulf %277, %294 : vector<8x128xf32>
    %296 = arith.addf %293, %295 : vector<8x128xf32>
    %297 = vector.broadcast %33 : f32 to vector<8x128xf32>
    %298 = arith.mulf %281, %297 : vector<8x128xf32>
    %299 = arith.addf %296, %298 : vector<8x128xf32>
    %300 = vector.broadcast %96 : f32 to vector<8x128xf32>
    %301 = arith.addf %299, %300 : vector<8x128xf32>
    %302 = vector.broadcast %18 : f32 to vector<8x128xf32>
    %303 = arith.mulf %273, %302 : vector<8x128xf32>
    %304 = vector.broadcast %27 : f32 to vector<8x128xf32>
    %305 = arith.mulf %277, %304 : vector<8x128xf32>
    %306 = arith.addf %303, %305 : vector<8x128xf32>
    %307 = vector.broadcast %36 : f32 to vector<8x128xf32>
    %308 = arith.mulf %281, %307 : vector<8x128xf32>
    %309 = arith.addf %306, %308 : vector<8x128xf32>
    %310 = vector.broadcast %99 : f32 to vector<8x128xf32>
    %311 = arith.addf %309, %310 : vector<8x128xf32>
    %312 = math.tanh %291 : vector<8x128xf32>
    %313 = vector.broadcast %123 : f32 to vector<8x128xf32>
    %314 = arith.mulf %313, %312 : vector<8x128xf32>
    %315 = arith.addf %291, %314 : vector<8x128xf32>
    %316 = math.tanh %301 : vector<8x128xf32>
    %317 = vector.broadcast %126 : f32 to vector<8x128xf32>
    %318 = arith.mulf %317, %316 : vector<8x128xf32>
    %319 = arith.addf %301, %318 : vector<8x128xf32>
    %320 = math.tanh %311 : vector<8x128xf32>
    %321 = vector.broadcast %129 : f32 to vector<8x128xf32>
    %322 = arith.mulf %321, %320 : vector<8x128xf32>
    %323 = arith.addf %311, %322 : vector<8x128xf32>
    %324 = vector.broadcast %39 : f32 to vector<8x128xf32>
    %325 = arith.mulf %315, %324 : vector<8x128xf32>
    %326 = vector.broadcast %48 : f32 to vector<8x128xf32>
    %327 = arith.mulf %319, %326 : vector<8x128xf32>
    %328 = arith.addf %325, %327 : vector<8x128xf32>
    %329 = vector.broadcast %57 : f32 to vector<8x128xf32>
    %330 = arith.mulf %323, %329 : vector<8x128xf32>
    %331 = arith.addf %328, %330 : vector<8x128xf32>
    %332 = vector.broadcast %102 : f32 to vector<8x128xf32>
    %333 = arith.addf %331, %332 : vector<8x128xf32>
    %334 = vector.broadcast %42 : f32 to vector<8x128xf32>
    %335 = arith.mulf %315, %334 : vector<8x128xf32>
    %336 = vector.broadcast %51 : f32 to vector<8x128xf32>
    %337 = arith.mulf %319, %336 : vector<8x128xf32>
    %338 = arith.addf %335, %337 : vector<8x128xf32>
    %339 = vector.broadcast %60 : f32 to vector<8x128xf32>
    %340 = arith.mulf %323, %339 : vector<8x128xf32>
    %341 = arith.addf %338, %340 : vector<8x128xf32>
    %342 = vector.broadcast %105 : f32 to vector<8x128xf32>
    %343 = arith.addf %341, %342 : vector<8x128xf32>
    %344 = vector.broadcast %45 : f32 to vector<8x128xf32>
    %345 = arith.mulf %315, %344 : vector<8x128xf32>
    %346 = vector.broadcast %54 : f32 to vector<8x128xf32>
    %347 = arith.mulf %319, %346 : vector<8x128xf32>
    %348 = arith.addf %345, %347 : vector<8x128xf32>
    %349 = vector.broadcast %63 : f32 to vector<8x128xf32>
    %350 = arith.mulf %323, %349 : vector<8x128xf32>
    %351 = arith.addf %348, %350 : vector<8x128xf32>
    %352 = vector.broadcast %108 : f32 to vector<8x128xf32>
    %353 = arith.addf %351, %352 : vector<8x128xf32>
    %354 = math.tanh %333 : vector<8x128xf32>
    %355 = vector.broadcast %132 : f32 to vector<8x128xf32>
    %356 = arith.mulf %355, %354 : vector<8x128xf32>
    %357 = arith.addf %333, %356 : vector<8x128xf32>
    %358 = math.tanh %343 : vector<8x128xf32>
    %359 = vector.broadcast %135 : f32 to vector<8x128xf32>
    %360 = arith.mulf %359, %358 : vector<8x128xf32>
    %361 = arith.addf %343, %360 : vector<8x128xf32>
    %362 = math.tanh %353 : vector<8x128xf32>
    %363 = vector.broadcast %138 : f32 to vector<8x128xf32>
    %364 = arith.mulf %363, %362 : vector<8x128xf32>
    %365 = arith.addf %353, %364 : vector<8x128xf32>
    %366 = vector.broadcast %66 : f32 to vector<8x128xf32>
    %367 = arith.mulf %357, %366 : vector<8x128xf32>
    %368 = vector.broadcast %69 : f32 to vector<8x128xf32>
    %369 = arith.mulf %361, %368 : vector<8x128xf32>
    %370 = arith.addf %367, %369 : vector<8x128xf32>
    %371 = vector.broadcast %72 : f32 to vector<8x128xf32>
    %372 = arith.mulf %365, %371 : vector<8x128xf32>
    %373 = arith.addf %370, %372 : vector<8x128xf32>
    %374 = vector.broadcast %111 : f32 to vector<8x128xf32>
    %375 = arith.addf %373, %374 : vector<8x128xf32>
    %376 = arith.negf %375 : vector<8x128xf32>
    %377 = math.exp %376 : vector<8x128xf32>
    %cst_3 = arith.constant 1.000000e+00 : f32
    %378 = vector.broadcast %cst_3 : f32 to vector<8x128xf32>
    %379 = arith.addf %378, %377 : vector<8x128xf32>
    %380 = arith.divf %378, %379 : vector<8x128xf32>
    %381 = arith.subf %263, %380 : vector<8x128xf32>
    %c0_4 = arith.constant 0 : index
    %c0_5 = arith.constant 0 : index
    %c0_6 = arith.constant 0 : index
    %c0_7 = arith.constant 0 : index
    %382 = vector.load %arg5[%c0_4, %c0_5, %c0_6, %c0_7] : memref<1x1x8x128xf32, #tpu.memory_space<vmem>>, vector<1x1x8x128xf32>
    %383 = vector.shape_cast %382 : vector<1x1x8x128xf32> to vector<8x128xf32>
    %384 = vector.shape_cast %381 : vector<8x128xf32> to vector<1x1x8x128xf32>
    tpu.vector_store %arg5[%c0_4, %c0_5, %c0_6, %c0_7], %384 {strides = array<i32>} : memref<1x1x8x128xf32, #tpu.memory_space<vmem>>, vector<1x1x8x128xf32>,
    return
  }
  func.func @transform_0(%arg0: i32, %arg1: i32, %arg2: i32, %arg3: memref<256xf32, #tpu.memory_space<smem>>) -> (i32, i32, i32, i32) {
    %c0_i32 = arith.constant 0 : i32
    %c0_i32_0 = arith.constant 0 : i32
    return %arg1, %arg0, %arg2, %c0_i32 : i32, i32, i32, i32
  }
  func.func @transform_1(%arg0: i32, %arg1: i32, %arg2: i32, %arg3: memref<256xf32, #tpu.memory_space<smem>>) -> (i32, i32, i32, i32) {
    %c0_i32 = arith.constant 0 : i32
    %c0_i32_0 = arith.constant 0 : i32
    return %arg1, %arg0, %arg2, %c0_i32 : i32, i32, i32, i32
  }
}

</mosaic_0001>

<llo_original>
// kernel: tpu_custom_call.1
$region0: #{tpu_custom_call.1}
  #allocation0 [shape = 'u32[]', space=smem, size = 0x4, offset = 0x4, fixed_abs, tag = 'smem constant byte address 0x4 - core index']
  #allocation1 [shape = 'u32[144,128]{1,0:T(1,128)}', space=vmem, size = 0x12000, scoped, tag = 'internal scratch']
  #allocation2 [shape = 's32[1]{0}', space=sflag, size = 0x4, scoped, tag = 'scoped memory for tpu_custom_call.1']
  #allocation3 [shape = 'u8[1024]{0}', space=smem, size = 0x400, scoped, tag = 'prefetched SMEM operand 0']
  %s0 = inlined_call_operand.hbm [shape: f32[256], index: 0, kind: input, shape index: {}]
  %s1 = inlined_call_operand.hbm [shape: f32[2,4,8,128], index: 1, kind: input, shape index: {}]
  %s2 = inlined_call_operand.hbm [shape: f32[2,4,8,128], index: 2, kind: output, shape index: {}]
  %s3 = sld [smem:[#allocation0]]
  $region41: #{tpu_custom_call.1} parent=0
    _
  %s5 = ssub.s32 1, %s3
  %s6 = scalar_select 0, %s5, %s3
  %8 = dma.hbm_to_smem %s0, 32, [#allocation3], [#allocation2]
  %9 = dma.done [#allocation2], 32
  %10 = sfence
  $region1: #{tpu_custom_call.1} parent=0
    #allocation4 [shape = 'u8[8192]{0}', space=vmem, size = 0x2000, scoped, tag = 'input window, operand 1']
    #allocation5 [shape = 's32[2]{0}', space=sflag, size = 0x8, scoped, tag = 'scoped memory for tpu_custom_call.1']
    #allocation6 [shape = 's32[2]{0}', space=sflag, size = 0x8, scoped, tag = 'scoped memory for tpu_custom_call.1']
    #allocation7 [shape = 'u8[8192]{0}', space=vmem, size = 0x2000, scoped, tag = 'output window, operand 0']
    %11 = vsyncpa [#allocation5], 0
    %s12 = scalar_lea.sflag [#allocation5], 1
    %13 = vsyncpa %s12, 0
    %14 = vsyncpa [#allocation6], 0
    %s15 = scalar_lea.sflag [#allocation6], 1
    %16 = vsyncpa %s15, 0
    loop: start=0, step=1, limit=10
    $region2: #{tpu_custom_call.1} parent=1 // loop_pre_header
      _
    $region3: #{tpu_custom_call.1} parent=1 // loop_header
      %s18 = sphi 0, %s22
      %p19 = scmp.ge.s32.totalorder %s18, 10
      %s25 = sphi 0, %s44
      %s26 = sphi 0, %s40
      %s27 = sphi 0, %s36
      %s28 = sphi 0, %s25
      %s29 = sphi 0, %s26
      %s30 = sphi 0, %s27
      %s31 = sphi 0, %s28
      %s32 = sphi 0, %s29
      %s33 = sphi 0, %s30
      %s51 = sphi 0, %s53
      %s54 = sphi 0, %s51
      %s55 = sphi 0, %s54
      %s71 = sphi 0, %s55
      %s81 = sphi 0, %s83
      %s84 = sphi 0, %s81
      %s85 = sphi 0, %s84
      %s101 = sphi 0, %s85
    $region4: #{tpu_custom_call.1} parent=1 // loop_header_branch
      %21 = sbr.rel (%p19) target = $region8
    $region5: #{tpu_custom_call.1} parent=1 // loop_body
      %s23 = ssub.s32 %s18, 1
      %s24 = ssub.s32 %s18, 2
      %s34 = sadd.s32 1, %s27
      %p35 = scmp.ge.s32.totalorder %s34, 1
      %s36 = scalar_select %p35, 0, %s34
      %s37 = sadd.s32 1, %s26
      %s38 = scalar_select %p35, %s37, %s26
      %p39 = scmp.ge.s32.totalorder %s38, 2
      %s40 = scalar_select %p39, 0, %s38
      %s41 = sadd.s32 1, %s25
      %s42 = scalar_select %p39, %s41, %s25
      %p43 = scmp.ge.s32.totalorder %s42, 4
      %s44 = scalar_select %p43, 0, %s42
      %s45 = ssub.s32 %s26, %s40
      %s46 = ssub.s32 %s25, %s44
      %s47 = sor.u32 %s45, %s46
      %s48 = ssub.s32 %s27, %s36
      %s49 = sor.u32 %s47, %s48
      %p50 = scmp.eq.s32.totalorder %s49, 0
      %s52 = sadd.s32 %s51, 1
      %s53 = scalar_select %p50, %s51, %s52
      %p56 = pneg %p50
      %p57 = scmp.eq.s32.totalorder %s18, 7
      %p58 = por %p56, %p57
      %p59 = scmp.ne.s32.totalorder %s51, %s54
      %p60 = scmp.eq.s32.totalorder %s18, 0
      %p61 = por %p59, %p60
      %p62 = scmp.ne.s32.totalorder %s51, %s54
      %p63 = scmp.eq.s32.totalorder %s23, 7
      %p64 = por %p62, %p63
      %p65 = scmp.ne.s32.totalorder %s54, %s55
      %p66 = scmp.eq.s32.totalorder %s23, 0
      %p67 = por %p65, %p66
      %p68 = scmp.ne.s32.totalorder %s54, %s55
      %p69 = scmp.eq.s32.totalorder %s24, 7
      %p70 = por %p68, %p69
      %p72 = scmp.ne.s32.totalorder %s55, %s71
      %p73 = scmp.eq.s32.totalorder %s24, 0
      %p74 = por %p72, %p73
      %s75 = ssub.s32 %s26, %s40
      %s76 = ssub.s32 %s25, %s44
      %s77 = sor.u32 %s75, %s76
      %s78 = ssub.s32 %s27, %s36
      %s79 = sor.u32 %s77, %s78
      %p80 = scmp.eq.s32.totalorder %s79, 0
      %s82 = sadd.s32 %s81, 1
      %s83 = scalar_select %p80, %s81, %s82
      %p86 = pneg %p80
      %p87 = scmp.eq.s32.totalorder %s18, 7
      %p88 = por %p86, %p87
      %p89 = scmp.ne.s32.totalorder %s81, %s84
      %p90 = scmp.eq.s32.totalorder %s18, 0
      %p91 = por %p89, %p90
      %p92 = scmp.ne.s32.totalorder %s81, %s84
      %p93 = scmp.eq.s32.totalorder %s23, 7
      %p94 = por %p92, %p93
      %p95 = scmp.ne.s32.totalorder %s84, %s85
      %p96 = scmp.eq.s32.totalorder %s23, 0
      %p97 = por %p95, %p96
      %p98 = scmp.ne.s32.totalorder %s84, %s85
      %p99 = scmp.eq.s32.totalorder %s24, 7
      %p100 = por %p98, %p99
      %p102 = scmp.ne.s32.totalorder %s85, %s101
      %p103 = scmp.eq.s32.totalorder %s24, 0
      %p104 = por %p102, %p103
      %p105 = scmp.le.s32.totalorder 1, %s18
      %p106 = scmp.lt.s32.totalorder %s18, 9
      %p107 = pnand %p105, %p106
      %p108 = pneg %p107
      // Predicated region
      $region9: #{tpu_custom_call.1} parent=5 // pred_check
        _
      $region10: #{tpu_custom_call.1} parent=5 // pred_check_branch
        %110 = sbr.rel (%p107) target = $region12
      $region11: #{tpu_custom_call.1} parent=5 // pred_region
        %s111 = ssub.s32 %s18, 1
      $region12: #{tpu_custom_call.1} parent=5 // pred_fallthru
        _
      %p112 = scmp.lt.s32.totalorder %s18, 8
      // Predicated region
      $region13: #{tpu_custom_call.1} parent=5 // pred_check
        %p113 = pneg %p112
      $region14: #{tpu_custom_call.1} parent=5 // pred_check_branch
        %115 = sbr.rel (%p113) target = $region16
      $region15: #{tpu_custom_call.1} parent=5 // pred_region
        // Predicated region
        $region17: #{tpu_custom_call.1} parent=15 // pred_check
          %p116 = pneg %p61
        $region18: #{tpu_custom_call.1} parent=15 // pred_check_branch
          %118 = sbr.rel (%p116) target = $region20
        $region19: #{tpu_custom_call.1} parent=15 // pred_region
          %s119 = sand.u32 %s51, 1
          %s120 = scalar_lea.sflag [#allocation5], %s119
          %s121 = sand.u32 %s51, 1
          %s122 = smul.addr %s121, 8
          %s123 = scalar_lea.vmem [#allocation4], %s122
          %s125 = ssub.s32 128, 128
          %126 = vsyncadd %s120, %s125
          %s127 = sadd.s32 %s27, %s25
          %s128 = smul.addr %s26, 4
          %s129 = sadd.s32 %s127, %s128
          %s130 = smul.addr %s129, 128
          %s131 = scalar_lea.hbm %s1, %s130
          %s133 = sshll.u32 %s123, 4
          %s134 = int_to_ptr.vmem [resolvable:$true] %s133
          %136 = dma.hbm_to_vmem [thread:$0]  %s131, 128, %s134, %s120
        $region20: #{tpu_custom_call.1} parent=15 // pred_fallthru
          _
      $region16: #{tpu_custom_call.1} parent=5 // pred_fallthru
        _
      %p137 = scmp.le.s32.totalorder 1, %s18
      %p138 = scmp.lt.s32.totalorder %s18, 9
      %p139 = pnand %p137, %p138
      %p140 = pneg %p139
      // Predicated region
      $region21: #{tpu_custom_call.1} parent=5 // pred_check
        _
      $region22: #{tpu_custom_call.1} parent=5 // pred_check_branch
        %142 = sbr.rel (%p139) target = $region24
      $region23: #{tpu_custom_call.1} parent=5 // pred_region
        %s143 = ssub.s32 %s18, 1
        %s144 = sand.u32 %s54, 1
        %s145 = scalar_lea.sflag [#allocation5], %s144
        %s146 = sand.u32 %s54, 1
        %s147 = smul.addr %s146, 8
        %s148 = scalar_lea.vmem [#allocation4], %s147
        // Predicated region
        $region25: #{tpu_custom_call.1} parent=23 // pred_check
          %p149 = pneg %p67
        $region26: #{tpu_custom_call.1} parent=23 // pred_check_branch
          %151 = sbr.rel (%p149) target = $region28
        $region27: #{tpu_custom_call.1} parent=23 // pred_region
          %152 = dma.done %s145, 128
        $region28: #{tpu_custom_call.1} parent=23 // pred_fallthru
          _
        %s153 = sand.u32 %s54, 1
        %s154 = scalar_lea.sflag [#allocation5], %s153
        %s155 = sand.u32 %s54, 1
        %s156 = smul.addr %s155, 8
        %s157 = scalar_lea.vmem [#allocation4], %s156
        %p158 = pneg %p67
        %p159 = pneg %p64
        %p160 = pneg %p97
        %p161 = pneg %p94
        %s162 = sand.u32 %s84, 1
        %s163 = scalar_lea.sflag [#allocation6], %s162
        %s164 = sand.u32 %s84, 1
        %s165 = smul.addr %s164, 8
        %s166 = scalar_lea.vmem [#allocation7], %s165
        %s167 = smul.u32 %s28, 64
        %s168 = sld [smem:[#allocation3 + %s167]]
        %s169 = sadd.s32 %s167, 1
        %s170 = sld [smem:[#allocation3 + %s169]]
        %s171 = sadd.s32 %s167, 2
        %s172 = sld [smem:[#allocation3 + %s171]]
        %s173 = sadd.s32 %s167, 3
        %s174 = sld [smem:[#allocation3 + %s173]]
        %s175 = sadd.s32 %s167, 4
        %s176 = sld [smem:[#allocation3 + %s175]]
        %s177 = sadd.s32 %s167, 5
        %s178 = sld [smem:[#allocation3 + %s177]]
        %s179 = sadd.s32 %s167, 6
        %s180 = sld [smem:[#allocation3 + %s179]]
        %s181 = sadd.s32 %s167, 7
        %s182 = sld [smem:[#allocation3 + %s181]]
        %s183 = sadd.s32 %s167, 8
        %s184 = sld [smem:[#allocation3 + %s183]]
        %s185 = sadd.s32 %s167, 9
        %s186 = sld [smem:[#allocation3 + %s185]]
        %s187 = sadd.s32 %s167, 10
        %s188 = sld [smem:[#allocation3 + %s187]]
        %s189 = sadd.s32 %s167, 11
        %s190 = sld [smem:[#allocation3 + %s189]]
        %s191 = sadd.s32 %s167, 12
        %s192 = sld [smem:[#allocation3 + %s191]]
        %s193 = sadd.s32 %s167, 13
        %s194 = sld [smem:[#allocation3 + %s193]]
        %s195 = sadd.s32 %s167, 14
        %s196 = sld [smem:[#allocation3 + %s195]]
        %s197 = sadd.s32 %s167, 15
        %s198 = sld [smem:[#allocation3 + %s197]]
        %s199 = sadd.s32 %s167, 16
        %s200 = sld [smem:[#allocation3 + %s199]]
        %s201 = sadd.s32 %s167, 17
        %s202 = sld [smem:[#allocation3 + %s201]]
        %s203 = sadd.s32 %s167, 18
        %s204 = sld [smem:[#allocation3 + %s203]]
        %s205 = sadd.s32 %s167, 19
        %s206 = sld [smem:[#allocation3 + %s205]]
        %s207 = sadd.s32 %s167, 20
        %s208 = sld [smem:[#allocation3 + %s207]]
        %s209 = sadd.s32 %s167, 21
        %s210 = sld [smem:[#allocation3 + %s209]]
        %s211 = sadd.s32 %s167, 22
        %s212 = sld [smem:[#allocation3 + %s211]]
        %s213 = sadd.s32 %s167, 23
        %s214 = sld [smem:[#allocation3 + %s213]]
        %s215 = sadd.s32 %s167, 24
        %s216 = sld [smem:[#allocation3 + %s215]]
        %s217 = sadd.s32 %s167, 25
        %s218 = sld [smem:[#allocation3 + %s217]]
        %s219 = sadd.s32 %s167, 26
        %s220 = sld [smem:[#allocation3 + %s219]]
        %s221 = sadd.s32 %s167, 27
        %s222 = sld [smem:[#allocation3 + %s221]]
        %s223 = sadd.s32 %s167, 28
        %s224 = sld [smem:[#allocation3 + %s223]]
        %s225 = sadd.s32 %s167, 29
        %s226 = sld [smem:[#allocation3 + %s225]]
        %s227 = sadd.s32 %s167, 30
        %s228 = sld [smem:[#allocation3 + %s227]]
        %s229 = sadd.s32 %s167, 31
        %s230 = sld [smem:[#allocation3 + %s229]]
        %s231 = sadd.s32 %s167, 32
        %s232 = sld [smem:[#allocation3 + %s231]]
        %s233 = sadd.s32 %s167, 33
        %s234 = sld [smem:[#allocation3 + %s233]]
        %s235 = sadd.s32 %s167, 34
        %s236 = sld [smem:[#allocation3 + %s235]]
        %s237 = sadd.s32 %s167, 35
        %s238 = sld [smem:[#allocation3 + %s237]]
        %s239 = sadd.s32 %s167, 36
        %s240 = sld [smem:[#allocation3 + %s239]]
        %s241 = sadd.s32 %s167, 37
        %s242 = sld [smem:[#allocation3 + %s241]]
        %s243 = sadd.s32 %s167, 38
        %s244 = sld [smem:[#allocation3 + %s243]]
        %s245 = sadd.s32 %s167, 39
        %s246 = sld [smem:[#allocation3 + %s245]]
        %s247 = sadd.s32 %s167, 40
        %s248 = sld [smem:[#allocation3 + %s247]]
        %s249 = sadd.s32 %s167, 41
        %s250 = sld [smem:[#allocation3 + %s249]]
        %s251 = sadd.s32 %s167, 42
        %s252 = sld [smem:[#allocation3 + %s251]]
        %s253 = sadd.s32 %s167, 43
        %s254 = sld [smem:[#allocation3 + %s253]]
        %s255 = sadd.s32 %s167, 44
        %s256 = sld [smem:[#allocation3 + %s255]]
        %s257 = sadd.s32 %s167, 45
        %s258 = sld [smem:[#allocation3 + %s257]]
        %v259 = vld [vmem:[%s148] sm:$0xff]
        %v260 = vstv %s168
        %v261 = vmul.f32 %v259, %v260
        %v262 = vstv %s170
        %v263 = vmul.f32 %v259, %v262
        %v264 = vstv %s172
        %v265 = vmul.f32 %v259, %v264
        %v266 = vstv %s216
        %v267 = vadd.f32 %v261, %v266
        %v268 = vstv %s218
        %v269 = vadd.f32 %v263, %v268
        %v270 = vstv %s220
        %v271 = vadd.f32 %v265, %v270
        %v272 = vtanh.pop %v267
        %v273 = vstv %s242
        %v274 = vmul.f32 %v273, %v272
        %v275 = vadd.f32 %v267, %v274
        %v276 = vtanh.pop %v269
        %v277 = vstv %s244
        %v278 = vmul.f32 %v277, %v276
        %v279 = vadd.f32 %v269, %v278
        %v280 = vtanh.pop %v271
        %v281 = vstv %s246
        %v282 = vmul.f32 %v281, %v280
        %v283 = vadd.f32 %v271, %v282
        %v284 = vstv %s174
        %v285 = vmul.f32 %v275, %v284
        %v286 = vstv %s180
        %v287 = vmul.f32 %v279, %v286
        %v288 = vadd.f32 %v285, %v287
        %v289 = vstv %s186
        %v290 = vmul.f32 %v283, %v289
        %v291 = vadd.f32 %v288, %v290
        %v292 = vstv %s228
        %v293 = vadd.f32 %v291, %v292
        %v294 = vstv %s176
        %v295 = vmul.f32 %v275, %v294
        %v296 = vstv %s182
        %v297 = vmul.f32 %v279, %v296
        %v298 = vadd.f32 %v295, %v297
        %v299 = vstv %s188
        %v300 = vmul.f32 %v283, %v299
        %v301 = vadd.f32 %v298, %v300
        %v302 = vstv %s230
        %v303 = vadd.f32 %v301, %v302
        %v304 = vstv %s178
        %v305 = vmul.f32 %v275, %v304
        %v306 = vstv %s184
        %v307 = vmul.f32 %v279, %v306
        %v308 = vadd.f32 %v305, %v307
        %v309 = vstv %s190
        %v310 = vmul.f32 %v283, %v309
        %v311 = vadd.f32 %v308, %v310
        %v312 = vstv %s232
        %v313 = vadd.f32 %v311, %v312
        %v314 = vtanh.pop %v293
        %v315 = vstv %s248
        %v316 = vmul.f32 %v315, %v314
        %v317 = vadd.f32 %v293, %v316
        %v318 = vtanh.pop %v303
        %v319 = vstv %s250
        %v320 = vmul.f32 %v319, %v318
        %v321 = vadd.f32 %v303, %v320
        %v322 = vtanh.pop %v313
        %v323 = vstv %s252
        %v324 = vmul.f32 %v323, %v322
        %v325 = vadd.f32 %v313, %v324
        %v326 = vstv %s192
        %v327 = vmul.f32 %v317, %v326
        %v328 = vstv %s198
        %v329 = vmul.f32 %v321, %v328
        %v330 = vadd.f32 %v327, %v329
        %v331 = vstv %s204
        %v332 = vmul.f32 %v325, %v331
        %v333 = vadd.f32 %v330, %v332
        %v334 = vstv %s234
        %v335 = vadd.f32 %v333, %v334
        %v336 = vstv %s194
        %v337 = vmul.f32 %v317, %v336
        %v338 = vstv %s200
        %v339 = vmul.f32 %v321, %v338
        %v340 = vadd.f32 %v337, %v339
        %v341 = vstv %s206
        %v342 = vmul.f32 %v325, %v341
        %v343 = vadd.f32 %v340, %v342
        %v344 = vstv %s236
        %v345 = vadd.f32 %v343, %v344
        %v346 = vstv %s196
        %v347 = vmul.f32 %v317, %v346
        %v348 = vstv %s202
        %v349 = vmul.f32 %v321, %v348
        %v350 = vadd.f32 %v347, %v349
        %v351 = vstv %s208
        %v352 = vmul.f32 %v325, %v351
        %v353 = vadd.f32 %v350, %v352
        %v354 = vstv %s238
        %v355 = vadd.f32 %v353, %v354
        %v356 = vtanh.pop %v335
        %v357 = vstv %s254
        %v358 = vmul.f32 %v357, %v356
        %v359 = vadd.f32 %v335, %v358
        %v360 = vtanh.pop %v345
        %v361 = vstv %s256
        %v362 = vmul.f32 %v361, %v360
        %v363 = vadd.f32 %v345, %v362
        %v364 = vtanh.pop %v355
        %v365 = vstv %s258
        %v366 = vmul.f32 %v365, %v364
        %v367 = vadd.f32 %v355, %v366
        %v368 = vstv %s210
        %v369 = vmul.f32 %v359, %v368
        %v370 = vstv %s212
        %v371 = vmul.f32 %v363, %v370
        %v372 = vadd.f32 %v369, %v371
        %v373 = vstv %s214
        %v374 = vmul.f32 %v367, %v373
        %v375 = vadd.f32 %v372, %v374
        %v376 = vstv %s240
        %v377 = vadd.f32 %v375, %v376
        %v378 = vxor.u32 %v377, 2147483648
        %v379 = vmul.f32 %v378, 1.442695
        %v380 = vpow.pop %v379
        %v381 = vadd.f32 %v380, 1.0
        %v382 = vrcp.pop %v381
        %v383 = vmul.f32 1.0, %v382
        %v384 = vstv %s222
        %v385 = vadd.f32 %v261, %v384
        %v386 = vstv %s224
        %v387 = vadd.f32 %v263, %v386
        %v388 = vstv %s226
        %v389 = vadd.f32 %v265, %v388
        %v390 = vtanh.pop %v385
        %v391 = vmul.f32 %v273, %v390
        %v392 = vadd.f32 %v385, %v391
        %v393 = vtanh.pop %v387
        %v394 = vmul.f32 %v277, %v393
        %v395 = vadd.f32 %v387, %v394
        %v396 = vtanh.pop %v389
        %v397 = vmul.f32 %v281, %v396
        %v398 = vadd.f32 %v389, %v397
        %v399 = vmul.f32 %v392, %v284
        %v400 = vmul.f32 %v395, %v286
        %v401 = vadd.f32 %v399, %v400
        %v402 = vmul.f32 %v398, %v289
        %v403 = vadd.f32 %v401, %v402
        %v404 = vadd.f32 %v403, %v292
        %v405 = vmul.f32 %v392, %v294
        %v406 = vmul.f32 %v395, %v296
        %v407 = vadd.f32 %v405, %v406
        %v408 = vmul.f32 %v398, %v299
        %v409 = vadd.f32 %v407, %v408
        %v410 = vadd.f32 %v409, %v302
        %v411 = vmul.f32 %v392, %v304
        %v412 = vmul.f32 %v395, %v306
        %v413 = vadd.f32 %v411, %v412
        %v414 = vmul.f32 %v398, %v309
        %v415 = vadd.f32 %v413, %v414
        %v416 = vadd.f32 %v415, %v312
        %v417 = vtanh.pop %v404
        %v418 = vmul.f32 %v315, %v417
        %v419 = vadd.f32 %v404, %v418
        %v420 = vtanh.pop %v410
        %v421 = vmul.f32 %v319, %v420
        %v422 = vadd.f32 %v410, %v421
        %v423 = vtanh.pop %v416
        %v424 = vmul.f32 %v323, %v423
        %v425 = vadd.f32 %v416, %v424
        %v426 = vmul.f32 %v419, %v326
        %v427 = vmul.f32 %v422, %v328
        %v428 = vadd.f32 %v426, %v427
        %v429 = vmul.f32 %v425, %v331
        %v430 = vadd.f32 %v428, %v429
        %v431 = vadd.f32 %v430, %v334
        %v432 = vmul.f32 %v419, %v336
        %v433 = vmul.f32 %v422, %v338
        %v434 = vadd.f32 %v432, %v433
        %v435 = vmul.f32 %v425, %v341
        %v436 = vadd.f32 %v434, %v435
        %v437 = vadd.f32 %v436, %v344
        %v438 = vmul.f32 %v419, %v346
        %v439 = vmul.f32 %v422, %v348
        %v440 = vadd.f32 %v438, %v439
        %v441 = vmul.f32 %v425, %v351
        %v442 = vadd.f32 %v440, %v441
        %v443 = vadd.f32 %v442, %v354
        %v444 = vtanh.pop %v431
        %v445 = vmul.f32 %v357, %v444
        %v446 = vadd.f32 %v431, %v445
        %v447 = vtanh.pop %v437
        %v448 = vmul.f32 %v361, %v447
        %v449 = vadd.f32 %v437, %v448
        %v450 = vtanh.pop %v443
        %v451 = vmul.f32 %v365, %v450
        %v452 = vadd.f32 %v443, %v451
        %v453 = vmul.f32 %v446, %v368
        %v454 = vmul.f32 %v449, %v370
        %v455 = vadd.f32 %v453, %v454
        %v456 = vmul.f32 %v452, %v373
        %v457 = vadd.f32 %v455, %v456
        %v458 = vadd.f32 %v457, %v376
        %v459 = vxor.u32 %v458, 2147483648
        %v460 = vmul.f32 %v459, 1.442695
        %v461 = vpow.pop %v460
        %v462 = vadd.f32 %v461, 1.0
        %v463 = vrcp.pop %v462
        %v464 = vmul.f32 1.0, %v463
        %v465 = vsub.f32 %v383, %v464
        %466 = vst [vmem:[%s166] sm:$0xff] %v465
        %s467 = sand.u32 %s84, 1
        %s468 = scalar_lea.sflag [#allocation6], %s467
        %s469 = sand.u32 %s84, 1
        %s470 = smul.addr %s469, 8
        %s471 = scalar_lea.vmem [#allocation7], %s470
        // Predicated region
        $region29: #{tpu_custom_call.1} parent=23 // pred_check
          %p472 = pneg %p94
        $region30: #{tpu_custom_call.1} parent=23 // pred_check_branch
          %474 = sbr.rel (%p472) target = $region32
        $region31: #{tpu_custom_call.1} parent=23 // pred_region
          %s476 = ssub.s32 128, 128
          %477 = vsyncadd %s468, %s476
          %s478 = sadd.s32 %s30, %s28
          %s479 = smul.addr %s29, 4
          %s480 = sadd.s32 %s478, %s479
          %s481 = smul.addr %s480, 128
          %s482 = scalar_lea.hbm %s2, %s481
          %s484 = sshll.u32 %s471, 4
          %s485 = int_to_ptr.vmem [resolvable:$true] %s484
          %487 = dma.vmem_to_hbm [thread:$0]  %s485, 128, %s482, %s468
        $region32: #{tpu_custom_call.1} parent=23 // pred_fallthru
          _
      $region24: #{tpu_custom_call.1} parent=5 // pred_fallthru
        _
      %p488 = scmp.le.s32.totalorder 2, %s18
      // Predicated region
      $region33: #{tpu_custom_call.1} parent=5 // pred_check
        %p489 = pneg %p488
      $region34: #{tpu_custom_call.1} parent=5 // pred_check_branch
        %491 = sbr.rel (%p489) target = $region36
      $region35: #{tpu_custom_call.1} parent=5 // pred_region
        %s492 = ssub.s32 %s18, 2
        // Predicated region
        $region37: #{tpu_custom_call.1} parent=35 // pred_check
          %p493 = pneg %p100
        $region38: #{tpu_custom_call.1} parent=35 // pred_check_branch
          %495 = sbr.rel (%p493) target = $region40
        $region39: #{tpu_custom_call.1} parent=35 // pred_region
          %s496 = sand.u32 %s85, 1
          %s497 = scalar_lea.sflag [#allocation6], %s496
          %s498 = sand.u32 %s85, 1
          %s499 = smul.addr %s498, 8
          %s500 = scalar_lea.vmem [#allocation7], %s499
          %501 = dma.done %s497, 128
        $region40: #{tpu_custom_call.1} parent=35 // pred_fallthru
          _
      $region36: #{tpu_custom_call.1} parent=5 // pred_fallthru
        _
    $region6: #{tpu_custom_call.1} parent=1 // loop_footer
      %s22 = sadd.s32 1, %s18
    $region7: #{tpu_custom_call.1} parent=1 // loop_footer_branch
      %17 = sbr.rel target = $region3
    $region8: #{tpu_custom_call.1} parent=1 // loop_exit
      _
    %502 = vsyncpa [#allocation5], 1
    %s503 = scalar_lea.sflag [#allocation5], 1
    %504 = vsyncpa %s503, 1
    %505 = vsyncpa [#allocation6], 1
    %s506 = scalar_lea.sflag [#allocation6], 1
    %507 = vsyncpa %s506, 1

</llo_original>
